<compile_context>
chip_gen: v6e
topology: v6e:2x2x1
jax: 0.10.0
libtpu: 0.0.40
codegen_flags: <defaults>
</compile_context>

<pallas_src>
from functools import partial

import jax
import jax.numpy as jnp
from jax.experimental import pallas as pl
from jax.experimental.pallas import tpu as pltpu


def _ce_tile_kernel(logits_ref, targets_ref, out_ref, *, n_rows, tile_n, masked):
    """Cross-entropy partial sum for one batch tile.

    logits_ref : (TILE_N, C) VMEM tile (input dtype, upcast here)
    targets_ref: (TILE_N, 1) int32 VMEM tile
    out_ref    : (1, 1, 128) float32 VMEM tile (tile CE sum, lane-broadcast)
    """
    x = logits_ref[...].astype(jnp.float32)                       # (TN, C)
    tgt = targets_ref[...]                                        # (TN, 1) int32
    tn, c = x.shape

    # Numerically-stable per-row CE; `shifted` is computed once and consumed by
    # both lane reductions (exp-sum and target-select-sum).
    row_max = jnp.max(x, axis=-1, keepdims=True)                  # (TN, 1)
    shifted = x - row_max                                         # (TN, C)
    sum_exp = jnp.sum(jnp.exp(shifted), axis=-1, keepdims=True)   # (TN, 1)

    class_ids = jax.lax.broadcasted_iota(jnp.int32, (tn, c), 1)
    tgt_shifted = jnp.sum(jnp.where(class_ids == tgt, shifted, 0.0),
                          axis=-1, keepdims=True)                 # (TN, 1)

    # ce = logsumexp(x) - x[target] = log(sum_exp) - (x[target] - row_max)
    ce = jnp.log(sum_exp) - tgt_shifted                           # (TN, 1)

    if masked:  # static: only emitted when the last tile is ragged / padded
        row_ids = (pl.program_id(0) * tile_n
                   + jax.lax.broadcasted_iota(jnp.int32, (tn, 1), 0))
        ce = jnp.where(row_ids < n_rows, ce, 0.0)

    partial_sum = jnp.sum(ce, axis=0, keepdims=True)              # (1, 1)
    out_ref[...] = jnp.broadcast_to(partial_sum.reshape(1, 1, 1), (1, 1, 128))


def _vmem_capacity_bytes():
    """Physical VMEM of the current chip (fallback: 64 MiB, safe on v7x too)."""
    try:
        info = pltpu.get_tpu_info()
        cap = getattr(info, "vmem_capacity_bytes", None)
        if cap:
            return int(cap)
    except Exception:
        pass
    return 64 << 20


def _pick_tile_n(n, c, itemsize, sublane, vmem_cap):
    """Largest sublane-aligned batch tile whose real VMEM footprint fits the chip.

    Accounts for lane padding (C rounded up to 128), the f32 in-kernel
    temporaries, and the lane-padded (tile_n, 1) column intermediates.
    """
    c_lanes = ((c + 127) // 128) * 128
    per_row = (2 * c_lanes * itemsize   # double-buffered logits block (native dtype)
               + 3 * c_lanes * 4        # f32 upcast / shifted / exp temporaries
               + 6 * 128 * 4)           # (tile_n,1) columns: targets (x2 bufs) + f32 temps
    budget = int(0.65 * vmem_cap)       # generation-aware: ~41 MiB v7x, ~83 MiB v5e/v6e
    rows = max(sublane, budget // per_row)
    rows = min(rows, 1 << 16)           # keep per-step latency reasonable
    rows = max(sublane, (rows // sublane) * sublane)
    return int(rows)


def focal_loss(logits, targets, gamma=2.0, alpha=0.25, tile_n=None):
    """logits: (N, C) float array; targets: (N,) int class indices. Returns scalar f32."""
    n, c = logits.shape
    itemsize = jnp.dtype(logits.dtype).itemsize
    sublane = {4: 8, 2: 16, 1: 32}.get(itemsize, 8)
    vmem_cap = _vmem_capacity_bytes()

    if tile_n is None:
        tile_n = _pick_tile_n(n, c, itemsize, sublane, vmem_cap)

    logits_in = logits
    targets2d = targets.astype(jnp.int32).reshape(n, 1)
    rows_in = n
    if n <= tile_n:
        # Whole batch fits in one tile: round up to the sublane multiple so the
        # block never exceeds the array. Copy cost is <= one tile (negligible).
        tile_n = max(sublane, ((n + sublane - 1) // sublane) * sublane)
        if tile_n != n:
            logits_in = jnp.pad(logits, ((0, tile_n - n), (0, 0)))
            targets2d = jnp.pad(targets2d, ((0, tile_n - n), (0, 0)))
        rows_in = tile_n
    # else: no full-array padding; the ragged last tile is masked in-kernel.

    num_tiles = pl.cdiv(rows_in, tile_n)
    masked = (num_tiles * tile_n != n)

    # VMEM budget (lane-padded, incl. in-kernel f32 temporaries), capped below
    # physical VMEM so v7x (64 MiB) keeps compiler headroom.
    c_lanes = ((c + 127) // 128) * 128
    block_in = tile_n * c_lanes * itemsize
    block_f32 = tile_n * c_lanes * 4
    col_bytes = tile_n * 128 * 4
    need = 2 * block_in + 3 * block_f32 + 6 * col_bytes + (2 << 20)
    vmem_limit = int(min(int(0.8 * vmem_cap), max(need + (4 << 20), 32 << 20)))
    vmem_limit = int(min(max(vmem_limit, need), vmem_cap))

    cost = pl.CostEstimate(
        flops=6 * rows_in * c,
        transcendentals=rows_in * c + rows_in,
        bytes_accessed=rows_in * c * itemsize + rows_in * 4 + num_tiles * 128 * 4,
    )

    kernel = partial(_ce_tile_kernel, n_rows=n, tile_n=tile_n, masked=masked)

    # TODO(synk): pipeline_mode=pl.Buffered(3) on the logits BlockSpec can hide
    # DMA-issue latency on v7x once compute-bound; left at the default depth here.
    partials = pl.pallas_call(
        kernel,
        out_shape=jax.ShapeDtypeStruct((num_tiles, 1, 128), jnp.float32),
        grid=(num_tiles,),
        in_specs=[
            pl.BlockSpec((tile_n, c), lambda i: (i, 0)),
            pl.BlockSpec((tile_n, 1), lambda i: (i, 0)),
        ],
        out_specs=pl.BlockSpec((1, 1, 128), lambda i: (i, 0, 0)),
        compiler_params=pltpu.CompilerParams(
            dimension_semantics=("parallel",),      # independent tiles -> 2 TCs on v7x
            vmem_limit_bytes=vmem_limit,
        ),
        cost_estimate=cost,
    )(logits_in, targets2d)

    # Final scalar math in the wrapper (mean over valid rows + focal scaling).
    ce = jnp.sum(partials[:, 0, 0]) / jnp.float32(n)
    pt = jnp.exp(-ce)
    out = jnp.float32(alpha) * (1.0 - pt) ** jnp.float32(gamma) * ce
    return out.astype(jnp.float32)

    # TODO(synk): very large class counts (one row > VMEM budget) would need a
    # second grid axis tiling C with an online logsumexp; not needed at these shapes.
    # TODO(synk): for tiny C (< 128) folding several rows into the 128-lane axis
    # would recover the ~4x wasted lanes; not done (gather logic gets complex).


def _focal_loss_ref(logits, targets, gamma=2.0, alpha=0.25):
    """Pure-JAX reference (mirrors nn.CrossEntropyLoss + focal scaling)."""
    logits = logits.astype(jnp.float32)
    logp = jax.nn.log_softmax(logits, axis=-1)
    ce = -jnp.mean(jnp.take_along_axis(logp, targets[:, None].astype(jnp.int32),
                                       axis=-1))
    pt = jnp.exp(-ce)
    return alpha * (1.0 - pt) ** gamma * ce


if __name__ == "__main__":
    key = jax.random.PRNGKey(0)
    k_logits, k_targets = jax.random.split(key)

    # N=10 deliberately exercises the in-kernel row masking path (tile rounds up
    # to 16 rows; rows 10..15 must not contribute to the partial sum).
    N, C = 10, 32
    logits = jax.random.normal(k_logits, (N, C), dtype=jnp.float32)
    targets = jax.random.randint(k_targets, (N,), 0, C, dtype=jnp.int32)

    out = focal_loss(logits, targets, gamma=2.0, alpha=0.25)
    out = jax.block_until_ready(out)

    ref = _focal_loss_ref(logits, targets, gamma=2.0, alpha=0.25)
    assert jnp.allclose(out, ref, rtol=1e-5, atol=1e-5), (out, ref)

    print("KERNEL_OK")
</pallas_src>

<mosaic_0001>
module attributes {stable_mosaic.version = 11 : i64} {
  func.func @_ce_tile_kernel(%arg0: i32, %arg1: memref<16x32xf32, #tpu.memory_space<vmem>>, %arg2: memref<16x1xi32, #tpu.memory_space<vmem>>, %arg3: memref<1x1x128xf32, #tpu.memory_space<vmem>>) attributes {dimension_semantics = [#tpu.dimension_semantics<parallel>], iteration_bounds = array<i64: 1>, scalar_prefetch = 0 : i64, scratch_operands = 0 : i64, tpu.core_type = #tpu.core_type<tc>, window_params = [{transform_indices = @transform_0, window_bounds = array<i64: 16, 32>}, {transform_indices = @transform_1, window_bounds = array<i64: 16, 1>}, {transform_indices = @transform_2, window_bounds = array<i64: 1, 1, 128>}]} {
    %c0 = arith.constant 0 : index
    %c0_0 = arith.constant 0 : index
    %0 = vector.load %arg1[%c0, %c0_0] : memref<16x32xf32, #tpu.memory_space<vmem>>, vector<16x32xf32>
    %c0_1 = arith.constant 0 : index
    %c0_2 = arith.constant 0 : index
    %1 = vector.load %arg2[%c0_1, %c0_2] : memref<16x1xi32, #tpu.memory_space<vmem>>, vector<16x1xi32>
    %cst = arith.constant dense<0xFF800000> : vector<16xf32>
    %2 = vector.multi_reduction <maximumf>, %0, %cst [1] : vector<16x32xf32> to vector<16xf32>
    %3 = vector.shape_cast %2 : vector<16xf32> to vector<16x1xf32>
    %4 = vector.broadcast %3 : vector<16x1xf32> to vector<16x32xf32>
    %5 = arith.subf %0, %4 : vector<16x32xf32>
    %6 = math.exp %5 : vector<16x32xf32>
    %cst_3 = arith.constant dense<0.000000e+00> : vector<16xf32>
    %7 = vector.multi_reduction <add>, %6, %cst_3 [1] : vector<16x32xf32> to vector<16xf32>
    %8 = vector.shape_cast %7 : vector<16xf32> to vector<16x1xf32>
    %9 = tpu.iota {dimensions = array<i32: 1>} : vector<16x32xi32>
    %10 = vector.broadcast %1 : vector<16x1xi32> to vector<16x32xi32>
    %11 = arith.cmpi eq, %9, %10 : vector<16x32xi32>
    %cst_4 = arith.constant 0.000000e+00 : f32
    %12 = vector.broadcast %cst_4 : f32 to vector<16x32xf32>
    %13 = arith.select %11, %5, %12 : vector<16x32xi1>, vector<16x32xf32>
    %cst_5 = arith.constant dense<0.000000e+00> : vector<16xf32>
    %14 = vector.multi_reduction <add>, %13, %cst_5 [1] : vector<16x32xf32> to vector<16xf32>
    %15 = vector.shape_cast %14 : vector<16xf32> to vector<16x1xf32>
    %16 = math.log %8 : vector<16x1xf32>
    %17 = arith.subf %16, %15 : vector<16x1xf32>
    %c16_i32 = arith.constant 16 : i32
    %18 = arith.muli %arg0, %c16_i32 : i32
    %19 = tpu.iota {dimensions = array<i32: 0>} : vector<16x1xi32>
    %20 = vector.broadcast %18 : i32 to vector<16x1xi32>
    %21 = arith.addi %20, %19 : vector<16x1xi32>
    %c10_i32 = arith.constant 10 : i32
    %22 = vector.broadcast %c10_i32 : i32 to vector<16x1xi32>
    %23 = arith.cmpi slt, %21, %22 : vector<16x1xi32>
    %cst_6 = arith.constant 0.000000e+00 : f32
    %24 = vector.broadcast %cst_6 : f32 to vector<16x1xf32>
    %25 = arith.select %23, %17, %24 : vector<16x1xi1>, vector<16x1xf32>
    %cst_7 = arith.constant dense<0.000000e+00> : vector<1xf32>
    %26 = vector.multi_reduction <add>, %25, %cst_7 [0] : vector<16x1xf32> to vector<1xf32>
    %27 = vector.shape_cast %26 : vector<1xf32> to vector<1x1xf32>
    %28 = vector.shape_cast %27 : vector<1x1xf32> to vector<1x1x1xf32>
    %29 = vector.shape_cast %28 : vector<1x1x1xf32> to vector<1x1x1xf32>
    %30 = vector.broadcast %29 : vector<1x1x1xf32> to vector<1x1x128xf32>
    %c0_8 = arith.constant 0 : index
    %c0_9 = arith.constant 0 : index
    %c0_10 = arith.constant 0 : index
    %31 = vector.load %arg3[%c0_8, %c0_9, %c0_10] : memref<1x1x128xf32, #tpu.memory_space<vmem>>, vector<1x1x128xf32>
    tpu.vector_store %arg3[%c0_8, %c0_9, %c0_10], %30 {strides = array<i32>} : memref<1x1x128xf32, #tpu.memory_space<vmem>>, vector<1x1x128xf32>,
    return
  }
  func.func @transform_0(%arg0: i32) -> (i32, i32) {
    %c0_i32 = arith.constant 0 : i32
    %c0_i32_0 = arith.constant 0 : i32
    return %arg0, %c0_i32 : i32, i32
  }
  func.func @transform_1(%arg0: i32) -> (i32, i32) {
    %c0_i32 = arith.constant 0 : i32
    %c0_i32_0 = arith.constant 0 : i32
    return %arg0, %c0_i32 : i32, i32
  }
  func.func @transform_2(%arg0: i32) -> (i32, i32, i32) {
    %c0_i32 = arith.constant 0 : i32
    %c0_i32_0 = arith.constant 0 : i32
    %c0_i32_1 = arith.constant 0 : i32
    return %arg0, %c0_i32, %c0_i32_0 : i32, i32, i32
  }
}

</mosaic_0001>

<llo_original>
// kernel: tpu_custom_call.1
$region0: #{tpu_custom_call.1}
  #allocation0 [shape = 'u32[]', space=smem, size = 0x4, offset = 0x4, fixed_abs, tag = 'smem constant byte address 0x4 - core index']
  #allocation1 [shape = 'u32[144,128]{1,0:T(1,128)}', space=vmem, size = 0x12000, scoped, tag = 'internal scratch']
  %s0 = inlined_call_operand.vmem [shape: f32[16,32], index: 0, kind: input, shape index: {}]
  %s1 = inlined_call_operand.vmem [shape: s32[16,1], index: 1, kind: input, shape index: {}]
  %s2 = inlined_call_operand.hbm [shape: f32[1,1,128], index: 2, kind: output, shape index: {}]
  %s3 = sld [smem:[#allocation0]]
  $region18: #{tpu_custom_call.1} parent=0
    _
  %s5 = ssub.s32 1, %s3
  %s6 = scalar_select 0, %s5, %s3
  $region1: #{tpu_custom_call.1} parent=0
    #allocation2 [shape = 'u8[512]{0}', space=vmem, size = 0x400, scoped, tag = 'output window, operand 0, single buffered']
    #allocation3 [shape = 's32[1]{0}', space=sflag, size = 0x4, scoped, tag = 'scoped memory for tpu_custom_call.1']
    %7 = vsyncpa [#allocation3], 0
    // Predicated region
    $region2: #{tpu_custom_call.1} parent=1 // pred_check
      _
    $region3: #{tpu_custom_call.1} parent=1 // pred_check_branch
      %9 = sbr.rel (0) target = $region5
    $region4: #{tpu_custom_call.1} parent=1 // pred_region
      _
    $region5: #{tpu_custom_call.1} parent=1 // pred_fallthru
      _
    // Predicated region
    $region6: #{tpu_custom_call.1} parent=1 // pred_check
      _
    $region7: #{tpu_custom_call.1} parent=1 // pred_check_branch
      %11 = sbr.rel (0) target = $region9
    $region8: #{tpu_custom_call.1} parent=1 // pred_region
      _
    $region9: #{tpu_custom_call.1} parent=1 // pred_fallthru
      _
    %v12 = vld [vmem:[%s0] sm:$0xff]
    %v13 = vld [vmem:[%s0 + $0x8] sm:$0xff]
    %v14 = vld [vmem:[%s1] sm:$0xff]
    %v15 = vld [vmem:[%s1 + $0x8] sm:$0xff]
    %vm16 = vcmask 261120
    %v17 = vsel %vm16, %v12, -inf
    %18 = vmax.xlane.f32.xlu0 %v17
    %v19 = vpop.xlane.xlu0 %18
    %v20 = vsel %vm16, %v13, -inf
    %21 = vmax.xlane.f32.xlu0 %v20
    %v22 = vpop.xlane.xlu0 %21
    %v23 = vsub.f32 %v12, %v19
    %v24 = vsub.f32 %v13, %v22
    %v25 = vmul.f32 %v23, 1.442695
    %v26 = vpow.pop %v25
    %v27 = vmul.f32 %v24, 1.442695
    %v28 = vpow.pop %v27
    %v29 = vsel %vm16, %v26, 0.0
    %30 = vadd.xlane.f32.xlu0 %v29
    %v31 = vpop.xlane.xlu0 %30
    %v32 = vsel %vm16, %v28, 0.0
    %33 = vadd.xlane.f32.xlu0 %v32
    %v34 = vpop.xlane.xlu0 %33
    %v35 = vlaneseq
    %v36 = vand.u32 %v35, 127
    %37 = vset.pattern.permute.xlu0 0
    %38 = vperm.xlu0 %37, %v14
    %v39 = vpop.permute.xlu0 %38
    %40 = vset.pattern.permute.xlu0 0
    %41 = vperm.xlu0 %40, %v15
    %v42 = vpop.permute.xlu0 %41
    %vm43 = vcmp.eq.s32.totalorder %v36, %v39
    %vm44 = vcmp.eq.s32.totalorder %v36, %v42
    %v45 = vsel %vm43, %v23, 0.0
    %v46 = vsel %vm44, %v24, 0.0
    %v47 = vsel %vm16, %v45, 0.0
    %48 = vadd.xlane.f32.xlu0 %v47
    %v49 = vpop.xlane.xlu0 %48
    %v50 = vsel %vm16, %v46, 0.0
    %51 = vadd.xlane.f32.xlu0 %v50
    %v52 = vpop.xlane.xlu0 %51
    %v53 = vlog2.pop %v31
    %v54 = vmul.f32 %v53, 0.6931472
    %v55 = vlog2.pop %v34
    %v56 = vmul.f32 %v55, 0.6931472
    %v57 = vsub.f32 %v54, %v49
    %v58 = vsub.f32 %v56, %v52
    %s59 = smul.u32 0, 16
    %v60 = vlaneseq
    %v61 = vshrl.u32 %v60, 7
    %v62 = vadd.s32 %v61, 8
    %v63 = vstv %s59
    %v64 = vadd.s32 %v63, %v61
    %v65 = vadd.s32 %v63, %v62
    %vm66 = vcmp.lt.s32.totalorder %v64, 10
    %vm67 = vcmp.lt.s32.totalorder %v65, 10
    %v68 = vsel %vm66, %v57, 0.0
    %v69 = vsel %vm67, %v58, 0.0
    %v70 = vadd.f32 %v68, %v69
    %v71 = vrot.slane %v70, 4
    %v72 = vadd.f32 %v70, %v71
    %v73 = vrot.slane %v72, 2
    %v74 = vadd.f32 %v72, %v73
    %v75 = vrot.slane %v74, 1
    %v76 = vadd.f32 %v74, %v75
    %77 = vst [vmem:[#allocation2] sm:$0x1] %v76
    // Predicated region
    $region10: #{tpu_custom_call.1} parent=1 // pred_check
      _
    $region11: #{tpu_custom_call.1} parent=1 // pred_check_branch
      %79 = sbr.rel (0) target = $region13
    $region12: #{tpu_custom_call.1} parent=1 // pred_region
      %s81 = ssub.s32 16, 16
      %82 = vsyncadd [#allocation3], %s81
      %s84 = sshll.u32 [#allocation2], 4
      %s85 = int_to_ptr.vmem [resolvable:$true] %s84
      %87 = dma.vmem_to_hbm [thread:$0]  %s85, 16, %s2, [#allocation3]
    $region13: #{tpu_custom_call.1} parent=1 // pred_fallthru
      _
    // Predicated region
    $region14: #{tpu_custom_call.1} parent=1 // pred_check
      _
    $region15: #{tpu_custom_call.1} parent=1 // pred_check_branch
      %89 = sbr.rel (0) target = $region17
    $region16: #{tpu_custom_call.1} parent=1 // pred_region
      %90 = dma.done [#allocation3], 16
    $region17: #{tpu_custom_call.1} parent=1 // pred_fallthru
      _
    %91 = vsyncpa [#allocation3], 1

</llo_original>
